<compile_context>
chip_gen: v6e
topology: v6e:2x2x1
jax: 0.10.0
libtpu: 0.0.40
codegen_flags: <defaults>
</compile_context>

<pallas_src>
import jax
import jax.numpy as jnp
from jax.experimental import pallas as pl
from jax.experimental.pallas import tpu as pltpu

LANE = 128


def _layer(h, w_ref, b_ref, apply_tanh):
    """One nn.Linear in (features, batch) layout, computed on the VPU.

    h:     (in_f, TB)   activations, batch on lanes.
    w_ref: (out_f, in_f) weight in native PyTorch nn.Linear layout.
    b_ref: (out_f, 1)    bias as a column.
    """
    w = w_ref[...]
    out_f, in_f = w.shape
    tb = h.shape[1]
    acc = jnp.broadcast_to(b_ref[...], (out_f, tb))
    # Unrolled broadcast multiply-adds: fan_in <= 16 terms per layer,
    # each an elementwise FMA on a (out_f, TB) slab.  No MXU, no XLU reduce.
    for i in range(in_f):
        acc = acc + w[:, i:i + 1] * h[i:i + 1, :]
    return jnp.tanh(acc) if apply_tanh else acc


def _mlp_kernel(x_ref,
                w1_ref, b1_ref, w2_ref, b2_ref, w3_ref, b3_ref,
                w4_ref, b4_ref, w5_ref, b5_ref, w6_ref, b6_ref,
                o_ref):
    h = x_ref[...]                                  # (2, TB)
    h = _layer(h, w1_ref, b1_ref, True)             # (4, TB)
    h = _layer(h, w2_ref, b2_ref, True)             # (10, TB)
    h = _layer(h, w3_ref, b3_ref, True)             # (16, TB)
    h = _layer(h, w4_ref, b4_ref, True)             # (10, TB)
    h = _layer(h, w5_ref, b5_ref, True)             # (4, TB)
    o_ref[...] = _layer(h, w6_ref, b6_ref, False).astype(o_ref.dtype)  # (2, TB)


def net_forward(x, params):
    """x: (B, 2) float32.  params: [(W (out,in), b (out,1))] * 6 (PyTorch layout)."""
    B = x.shape[0]

    # Lane-dense batch tile; pad B so the grid divides evenly.
    if B <= 2048:
        tb = ((B + LANE - 1) // LANE) * LANE
    else:
        tb = 2048
    b_pad = ((B + tb - 1) // tb) * tb
    n_tiles = b_pad // tb

    # (B, 2) -> (2, B_pad): features on sublanes, batch on lanes.
    xt = jnp.zeros((2, b_pad), jnp.float32).at[:, :B].set(x.T)

    flat = []
    for w, b in params:
        flat.extend([w, b])

    def full_spec(a):
        return pl.BlockSpec(a.shape, lambda i: (0, 0))

    in_specs = [pl.BlockSpec((2, tb), lambda i: (0, i))] + [full_spec(a) for a in flat]
    out_spec = pl.BlockSpec((2, tb), lambda i: (0, i))

    out_t = pl.pallas_call(
        _mlp_kernel,
        out_shape=jax.ShapeDtypeStruct((2, b_pad), jnp.float32),
        grid=(n_tiles,),
        in_specs=in_specs,
        out_specs=out_spec,
        compiler_params=pltpu.CompilerParams(
            dimension_semantics=("parallel",)),
    )(xt, *flat)

    # Back to (B, 2); drop batch padding.
    return out_t.T[:B]


def init_params(key):
    """Deterministic init in native nn.Linear layout: W (out,in), b stored as (out,1)."""
    sizes = [(2, 4), (4, 10), (10, 16), (16, 10), (10, 4), (4, 2)]  # (in, out)
    params = []
    for i, (fan_in, fan_out) in enumerate(sizes):
        kw, kb = jax.random.split(jax.random.fold_in(key, i))
        bound = 1.0 / jnp.sqrt(fan_in)
        w = jax.random.uniform(kw, (fan_out, fan_in), jnp.float32, -bound, bound)
        b = jax.random.uniform(kb, (fan_out, 1), jnp.float32, -bound, bound)
        params.append((w, b))
    return params


def net_reference(x, params):
    h = x
    for i, (w, b) in enumerate(params):
        h = h @ w.T + b.T
        if i < len(params) - 1:
            h = jnp.tanh(h)
    return h


if __name__ == "__main__":
    key = jax.random.PRNGKey(0)
    params = init_params(key)

    # Batch = 128 so batch-on-lanes is exactly one lane-dense vreg row.
    B = 128
    x = jax.random.uniform(jax.random.fold_in(key, 999), (B, 2), jnp.float32)

    out = jax.block_until_ready(net_forward(x, params))
    ref = net_reference(x, params)

    assert out.shape == (B, 2)
    assert jnp.allclose(out, ref, atol=1e-5, rtol=1e-5), "mismatch vs reference"

    print("KERNEL_OK")
</pallas_src>

<mosaic_0001>
module attributes {stable_mosaic.version = 11 : i64} {
  func.func @_mlp_kernel(%arg0: i32, %arg1: memref<2x128xf32, #tpu.memory_space<vmem>>, %arg2: memref<4x2xf32, #tpu.memory_space<vmem>>, %arg3: memref<4x1xf32, #tpu.memory_space<vmem>>, %arg4: memref<10x4xf32, #tpu.memory_space<vmem>>, %arg5: memref<10x1xf32, #tpu.memory_space<vmem>>, %arg6: memref<16x10xf32, #tpu.memory_space<vmem>>, %arg7: memref<16x1xf32, #tpu.memory_space<vmem>>, %arg8: memref<10x16xf32, #tpu.memory_space<vmem>>, %arg9: memref<10x1xf32, #tpu.memory_space<vmem>>, %arg10: memref<4x10xf32, #tpu.memory_space<vmem>>, %arg11: memref<4x1xf32, #tpu.memory_space<vmem>>, %arg12: memref<2x4xf32, #tpu.memory_space<vmem>>, %arg13: memref<2x1xf32, #tpu.memory_space<vmem>>, %arg14: memref<2x128xf32, #tpu.memory_space<vmem>>) attributes {dimension_semantics = [#tpu.dimension_semantics<parallel>], iteration_bounds = array<i64: 1>, scalar_prefetch = 0 : i64, scratch_operands = 0 : i64, tpu.core_type = #tpu.core_type<tc>, window_params = [{transform_indices = @transform_0, window_bounds = array<i64: 2, 128>}, {pipeline_mode = #tpu.pipeline_mode<synchronous>, transform_indices = @transform_1, window_bounds = array<i64: 4, 2>}, {pipeline_mode = #tpu.pipeline_mode<synchronous>, transform_indices = @transform_2, window_bounds = array<i64: 4, 1>}, {pipeline_mode = #tpu.pipeline_mode<synchronous>, transform_indices = @transform_3, window_bounds = array<i64: 10, 4>}, {pipeline_mode = #tpu.pipeline_mode<synchronous>, transform_indices = @transform_4, window_bounds = array<i64: 10, 1>}, {pipeline_mode = #tpu.pipeline_mode<synchronous>, transform_indices = @transform_5, window_bounds = array<i64: 16, 10>}, {pipeline_mode = #tpu.pipeline_mode<synchronous>, transform_indices = @transform_6, window_bounds = array<i64: 16, 1>}, {pipeline_mode = #tpu.pipeline_mode<synchronous>, transform_indices = @transform_7, window_bounds = array<i64: 10, 16>}, {pipeline_mode = #tpu.pipeline_mode<synchronous>, transform_indices = @transform_8, window_bounds = array<i64: 10, 1>}, {pipeline_mode = #tpu.pipeline_mode<synchronous>, transform_indices = @transform_9, window_bounds = array<i64: 4, 10>}, {pipeline_mode = #tpu.pipeline_mode<synchronous>, transform_indices = @transform_10, window_bounds = array<i64: 4, 1>}, {pipeline_mode = #tpu.pipeline_mode<synchronous>, transform_indices = @transform_11, window_bounds = array<i64: 2, 4>}, {pipeline_mode = #tpu.pipeline_mode<synchronous>, transform_indices = @transform_12, window_bounds = array<i64: 2, 1>}, {transform_indices = @transform_13, window_bounds = array<i64: 2, 128>}]} {
    %c0 = arith.constant 0 : index
    %c0_0 = arith.constant 0 : index
    %0 = vector.load %arg1[%c0, %c0_0] : memref<2x128xf32, #tpu.memory_space<vmem>>, vector<2x128xf32>
    %c0_1 = arith.constant 0 : index
    %c0_2 = arith.constant 0 : index
    %1 = vector.load %arg2[%c0_1, %c0_2] : memref<4x2xf32, #tpu.memory_space<vmem>>, vector<4x2xf32>
    %c0_3 = arith.constant 0 : index
    %c0_4 = arith.constant 0 : index
    %2 = vector.load %arg3[%c0_3, %c0_4] : memref<4x1xf32, #tpu.memory_space<vmem>>, vector<4x1xf32>
    %3 = vector.shape_cast %2 : vector<4x1xf32> to vector<4x1xf32>
    %4 = vector.broadcast %3 : vector<4x1xf32> to vector<4x128xf32>
    %5 = vector.extract_strided_slice %1 {offsets = [0, 0], sizes = [4, 1], strides = [1, 1]} : vector<4x2xf32> to vector<4x1xf32>
    %6 = vector.extract_strided_slice %0 {offsets = [0, 0], sizes = [1, 128], strides = [1, 1]} : vector<2x128xf32> to vector<1x128xf32>
    %7 = vector.broadcast %5 : vector<4x1xf32> to vector<4x128xf32>
    %8 = vector.broadcast %6 : vector<1x128xf32> to vector<4x128xf32>
    %9 = arith.mulf %7, %8 : vector<4x128xf32>
    %10 = arith.addf %4, %9 : vector<4x128xf32>
    %11 = vector.extract_strided_slice %1 {offsets = [0, 1], sizes = [4, 1], strides = [1, 1]} : vector<4x2xf32> to vector<4x1xf32>
    %12 = vector.extract_strided_slice %0 {offsets = [1, 0], sizes = [1, 128], strides = [1, 1]} : vector<2x128xf32> to vector<1x128xf32>
    %13 = vector.broadcast %11 : vector<4x1xf32> to vector<4x128xf32>
    %14 = vector.broadcast %12 : vector<1x128xf32> to vector<4x128xf32>
    %15 = arith.mulf %13, %14 : vector<4x128xf32>
    %16 = arith.addf %10, %15 : vector<4x128xf32>
    %17 = math.tanh %16 : vector<4x128xf32>
    %c0_5 = arith.constant 0 : index
    %c0_6 = arith.constant 0 : index
    %18 = vector.load %arg4[%c0_5, %c0_6] : memref<10x4xf32, #tpu.memory_space<vmem>>, vector<10x4xf32>
    %c0_7 = arith.constant 0 : index
    %c0_8 = arith.constant 0 : index
    %19 = vector.load %arg5[%c0_7, %c0_8] : memref<10x1xf32, #tpu.memory_space<vmem>>, vector<10x1xf32>
    %20 = vector.shape_cast %19 : vector<10x1xf32> to vector<10x1xf32>
    %21 = vector.broadcast %20 : vector<10x1xf32> to vector<10x128xf32>
    %22 = vector.extract_strided_slice %18 {offsets = [0, 0], sizes = [10, 1], strides = [1, 1]} : vector<10x4xf32> to vector<10x1xf32>
    %23 = vector.extract_strided_slice %17 {offsets = [0, 0], sizes = [1, 128], strides = [1, 1]} : vector<4x128xf32> to vector<1x128xf32>
    %24 = vector.broadcast %22 : vector<10x1xf32> to vector<10x128xf32>
    %25 = vector.broadcast %23 : vector<1x128xf32> to vector<10x128xf32>
    %26 = arith.mulf %24, %25 : vector<10x128xf32>
    %27 = arith.addf %21, %26 : vector<10x128xf32>
    %28 = vector.extract_strided_slice %18 {offsets = [0, 1], sizes = [10, 1], strides = [1, 1]} : vector<10x4xf32> to vector<10x1xf32>
    %29 = vector.extract_strided_slice %17 {offsets = [1, 0], sizes = [1, 128], strides = [1, 1]} : vector<4x128xf32> to vector<1x128xf32>
    %30 = vector.broadcast %28 : vector<10x1xf32> to vector<10x128xf32>
    %31 = vector.broadcast %29 : vector<1x128xf32> to vector<10x128xf32>
    %32 = arith.mulf %30, %31 : vector<10x128xf32>
    %33 = arith.addf %27, %32 : vector<10x128xf32>
    %34 = vector.extract_strided_slice %18 {offsets = [0, 2], sizes = [10, 1], strides = [1, 1]} : vector<10x4xf32> to vector<10x1xf32>
    %35 = vector.extract_strided_slice %17 {offsets = [2, 0], sizes = [1, 128], strides = [1, 1]} : vector<4x128xf32> to vector<1x128xf32>
    %36 = vector.broadcast %34 : vector<10x1xf32> to vector<10x128xf32>
    %37 = vector.broadcast %35 : vector<1x128xf32> to vector<10x128xf32>
    %38 = arith.mulf %36, %37 : vector<10x128xf32>
    %39 = arith.addf %33, %38 : vector<10x128xf32>
    %40 = vector.extract_strided_slice %18 {offsets = [0, 3], sizes = [10, 1], strides = [1, 1]} : vector<10x4xf32> to vector<10x1xf32>
    %41 = vector.extract_strided_slice %17 {offsets = [3, 0], sizes = [1, 128], strides = [1, 1]} : vector<4x128xf32> to vector<1x128xf32>
    %42 = vector.broadcast %40 : vector<10x1xf32> to vector<10x128xf32>
    %43 = vector.broadcast %41 : vector<1x128xf32> to vector<10x128xf32>
    %44 = arith.mulf %42, %43 : vector<10x128xf32>
    %45 = arith.addf %39, %44 : vector<10x128xf32>
    %46 = math.tanh %45 : vector<10x128xf32>
    %c0_9 = arith.constant 0 : index
    %c0_10 = arith.constant 0 : index
    %47 = vector.load %arg6[%c0_9, %c0_10] : memref<16x10xf32, #tpu.memory_space<vmem>>, vector<16x10xf32>
    %c0_11 = arith.constant 0 : index
    %c0_12 = arith.constant 0 : index
    %48 = vector.load %arg7[%c0_11, %c0_12] : memref<16x1xf32, #tpu.memory_space<vmem>>, vector<16x1xf32>
    %49 = vector.shape_cast %48 : vector<16x1xf32> to vector<16x1xf32>
    %50 = vector.broadcast %49 : vector<16x1xf32> to vector<16x128xf32>
    %51 = vector.extract_strided_slice %47 {offsets = [0, 0], sizes = [16, 1], strides = [1, 1]} : vector<16x10xf32> to vector<16x1xf32>
    %52 = vector.extract_strided_slice %46 {offsets = [0, 0], sizes = [1, 128], strides = [1, 1]} : vector<10x128xf32> to vector<1x128xf32>
    %53 = vector.broadcast %51 : vector<16x1xf32> to vector<16x128xf32>
    %54 = vector.broadcast %52 : vector<1x128xf32> to vector<16x128xf32>
    %55 = arith.mulf %53, %54 : vector<16x128xf32>
    %56 = arith.addf %50, %55 : vector<16x128xf32>
    %57 = vector.extract_strided_slice %47 {offsets = [0, 1], sizes = [16, 1], strides = [1, 1]} : vector<16x10xf32> to vector<16x1xf32>
    %58 = vector.extract_strided_slice %46 {offsets = [1, 0], sizes = [1, 128], strides = [1, 1]} : vector<10x128xf32> to vector<1x128xf32>
    %59 = vector.broadcast %57 : vector<16x1xf32> to vector<16x128xf32>
    %60 = vector.broadcast %58 : vector<1x128xf32> to vector<16x128xf32>
    %61 = arith.mulf %59, %60 : vector<16x128xf32>
    %62 = arith.addf %56, %61 : vector<16x128xf32>
    %63 = vector.extract_strided_slice %47 {offsets = [0, 2], sizes = [16, 1], strides = [1, 1]} : vector<16x10xf32> to vector<16x1xf32>
    %64 = vector.extract_strided_slice %46 {offsets = [2, 0], sizes = [1, 128], strides = [1, 1]} : vector<10x128xf32> to vector<1x128xf32>
    %65 = vector.broadcast %63 : vector<16x1xf32> to vector<16x128xf32>
    %66 = vector.broadcast %64 : vector<1x128xf32> to vector<16x128xf32>
    %67 = arith.mulf %65, %66 : vector<16x128xf32>
    %68 = arith.addf %62, %67 : vector<16x128xf32>
    %69 = vector.extract_strided_slice %47 {offsets = [0, 3], sizes = [16, 1], strides = [1, 1]} : vector<16x10xf32> to vector<16x1xf32>
    %70 = vector.extract_strided_slice %46 {offsets = [3, 0], sizes = [1, 128], strides = [1, 1]} : vector<10x128xf32> to vector<1x128xf32>
    %71 = vector.broadcast %69 : vector<16x1xf32> to vector<16x128xf32>
    %72 = vector.broadcast %70 : vector<1x128xf32> to vector<16x128xf32>
    %73 = arith.mulf %71, %72 : vector<16x128xf32>
    %74 = arith.addf %68, %73 : vector<16x128xf32>
    %75 = vector.extract_strided_slice %47 {offsets = [0, 4], sizes = [16, 1], strides = [1, 1]} : vector<16x10xf32> to vector<16x1xf32>
    %76 = vector.extract_strided_slice %46 {offsets = [4, 0], sizes = [1, 128], strides = [1, 1]} : vector<10x128xf32> to vector<1x128xf32>
    %77 = vector.broadcast %75 : vector<16x1xf32> to vector<16x128xf32>
    %78 = vector.broadcast %76 : vector<1x128xf32> to vector<16x128xf32>
    %79 = arith.mulf %77, %78 : vector<16x128xf32>
    %80 = arith.addf %74, %79 : vector<16x128xf32>
    %81 = vector.extract_strided_slice %47 {offsets = [0, 5], sizes = [16, 1], strides = [1, 1]} : vector<16x10xf32> to vector<16x1xf32>
    %82 = vector.extract_strided_slice %46 {offsets = [5, 0], sizes = [1, 128], strides = [1, 1]} : vector<10x128xf32> to vector<1x128xf32>
    %83 = vector.broadcast %81 : vector<16x1xf32> to vector<16x128xf32>
    %84 = vector.broadcast %82 : vector<1x128xf32> to vector<16x128xf32>
    %85 = arith.mulf %83, %84 : vector<16x128xf32>
    %86 = arith.addf %80, %85 : vector<16x128xf32>
    %87 = vector.extract_strided_slice %47 {offsets = [0, 6], sizes = [16, 1], strides = [1, 1]} : vector<16x10xf32> to vector<16x1xf32>
    %88 = vector.extract_strided_slice %46 {offsets = [6, 0], sizes = [1, 128], strides = [1, 1]} : vector<10x128xf32> to vector<1x128xf32>
    %89 = vector.broadcast %87 : vector<16x1xf32> to vector<16x128xf32>
    %90 = vector.broadcast %88 : vector<1x128xf32> to vector<16x128xf32>
    %91 = arith.mulf %89, %90 : vector<16x128xf32>
    %92 = arith.addf %86, %91 : vector<16x128xf32>
    %93 = vector.extract_strided_slice %47 {offsets = [0, 7], sizes = [16, 1], strides = [1, 1]} : vector<16x10xf32> to vector<16x1xf32>
    %94 = vector.extract_strided_slice %46 {offsets = [7, 0], sizes = [1, 128], strides = [1, 1]} : vector<10x128xf32> to vector<1x128xf32>
    %95 = vector.broadcast %93 : vector<16x1xf32> to vector<16x128xf32>
    %96 = vector.broadcast %94 : vector<1x128xf32> to vector<16x128xf32>
    %97 = arith.mulf %95, %96 : vector<16x128xf32>
    %98 = arith.addf %92, %97 : vector<16x128xf32>
    %99 = vector.extract_strided_slice %47 {offsets = [0, 8], sizes = [16, 1], strides = [1, 1]} : vector<16x10xf32> to vector<16x1xf32>
    %100 = vector.extract_strided_slice %46 {offsets = [8, 0], sizes = [1, 128], strides = [1, 1]} : vector<10x128xf32> to vector<1x128xf32>
    %101 = vector.broadcast %99 : vector<16x1xf32> to vector<16x128xf32>
    %102 = vector.broadcast %100 : vector<1x128xf32> to vector<16x128xf32>
    %103 = arith.mulf %101, %102 : vector<16x128xf32>
    %104 = arith.addf %98, %103 : vector<16x128xf32>
    %105 = vector.extract_strided_slice %47 {offsets = [0, 9], sizes = [16, 1], strides = [1, 1]} : vector<16x10xf32> to vector<16x1xf32>
    %106 = vector.extract_strided_slice %46 {offsets = [9, 0], sizes = [1, 128], strides = [1, 1]} : vector<10x128xf32> to vector<1x128xf32>
    %107 = vector.broadcast %105 : vector<16x1xf32> to vector<16x128xf32>
    %108 = vector.broadcast %106 : vector<1x128xf32> to vector<16x128xf32>
    %109 = arith.mulf %107, %108 : vector<16x128xf32>
    %110 = arith.addf %104, %109 : vector<16x128xf32>
    %111 = math.tanh %110 : vector<16x128xf32>
    %c0_13 = arith.constant 0 : index
    %c0_14 = arith.constant 0 : index
    %112 = vector.load %arg8[%c0_13, %c0_14] : memref<10x16xf32, #tpu.memory_space<vmem>>, vector<10x16xf32>
    %c0_15 = arith.constant 0 : index
    %c0_16 = arith.constant 0 : index
    %113 = vector.load %arg9[%c0_15, %c0_16] : memref<10x1xf32, #tpu.memory_space<vmem>>, vector<10x1xf32>
    %114 = vector.shape_cast %113 : vector<10x1xf32> to vector<10x1xf32>
    %115 = vector.broadcast %114 : vector<10x1xf32> to vector<10x128xf32>
    %116 = vector.extract_strided_slice %112 {offsets = [0, 0], sizes = [10, 1], strides = [1, 1]} : vector<10x16xf32> to vector<10x1xf32>
    %117 = vector.extract_strided_slice %111 {offsets = [0, 0], sizes = [1, 128], strides = [1, 1]} : vector<16x128xf32> to vector<1x128xf32>
    %118 = vector.broadcast %116 : vector<10x1xf32> to vector<10x128xf32>
    %119 = vector.broadcast %117 : vector<1x128xf32> to vector<10x128xf32>
    %120 = arith.mulf %118, %119 : vector<10x128xf32>
    %121 = arith.addf %115, %120 : vector<10x128xf32>
    %122 = vector.extract_strided_slice %112 {offsets = [0, 1], sizes = [10, 1], strides = [1, 1]} : vector<10x16xf32> to vector<10x1xf32>
    %123 = vector.extract_strided_slice %111 {offsets = [1, 0], sizes = [1, 128], strides = [1, 1]} : vector<16x128xf32> to vector<1x128xf32>
    %124 = vector.broadcast %122 : vector<10x1xf32> to vector<10x128xf32>
    %125 = vector.broadcast %123 : vector<1x128xf32> to vector<10x128xf32>
    %126 = arith.mulf %124, %125 : vector<10x128xf32>
    %127 = arith.addf %121, %126 : vector<10x128xf32>
    %128 = vector.extract_strided_slice %112 {offsets = [0, 2], sizes = [10, 1], strides = [1, 1]} : vector<10x16xf32> to vector<10x1xf32>
    %129 = vector.extract_strided_slice %111 {offsets = [2, 0], sizes = [1, 128], strides = [1, 1]} : vector<16x128xf32> to vector<1x128xf32>
    %130 = vector.broadcast %128 : vector<10x1xf32> to vector<10x128xf32>
    %131 = vector.broadcast %129 : vector<1x128xf32> to vector<10x128xf32>
    %132 = arith.mulf %130, %131 : vector<10x128xf32>
    %133 = arith.addf %127, %132 : vector<10x128xf32>
    %134 = vector.extract_strided_slice %112 {offsets = [0, 3], sizes = [10, 1], strides = [1, 1]} : vector<10x16xf32> to vector<10x1xf32>
    %135 = vector.extract_strided_slice %111 {offsets = [3, 0], sizes = [1, 128], strides = [1, 1]} : vector<16x128xf32> to vector<1x128xf32>
    %136 = vector.broadcast %134 : vector<10x1xf32> to vector<10x128xf32>
    %137 = vector.broadcast %135 : vector<1x128xf32> to vector<10x128xf32>
    %138 = arith.mulf %136, %137 : vector<10x128xf32>
    %139 = arith.addf %133, %138 : vector<10x128xf32>
    %140 = vector.extract_strided_slice %112 {offsets = [0, 4], sizes = [10, 1], strides = [1, 1]} : vector<10x16xf32> to vector<10x1xf32>
    %141 = vector.extract_strided_slice %111 {offsets = [4, 0], sizes = [1, 128], strides = [1, 1]} : vector<16x128xf32> to vector<1x128xf32>
    %142 = vector.broadcast %140 : vector<10x1xf32> to vector<10x128xf32>
    %143 = vector.broadcast %141 : vector<1x128xf32> to vector<10x128xf32>
    %144 = arith.mulf %142, %143 : vector<10x128xf32>
    %145 = arith.addf %139, %144 : vector<10x128xf32>
    %146 = vector.extract_strided_slice %112 {offsets = [0, 5], sizes = [10, 1], strides = [1, 1]} : vector<10x16xf32> to vector<10x1xf32>
    %147 = vector.extract_strided_slice %111 {offsets = [5, 0], sizes = [1, 128], strides = [1, 1]} : vector<16x128xf32> to vector<1x128xf32>
    %148 = vector.broadcast %146 : vector<10x1xf32> to vector<10x128xf32>
    %149 = vector.broadcast %147 : vector<1x128xf32> to vector<10x128xf32>
    %150 = arith.mulf %148, %149 : vector<10x128xf32>
    %151 = arith.addf %145, %150 : vector<10x128xf32>
    %152 = vector.extract_strided_slice %112 {offsets = [0, 6], sizes = [10, 1], strides = [1, 1]} : vector<10x16xf32> to vector<10x1xf32>
    %153 = vector.extract_strided_slice %111 {offsets = [6, 0], sizes = [1, 128], strides = [1, 1]} : vector<16x128xf32> to vector<1x128xf32>
    %154 = vector.broadcast %152 : vector<10x1xf32> to vector<10x128xf32>
    %155 = vector.broadcast %153 : vector<1x128xf32> to vector<10x128xf32>
    %156 = arith.mulf %154, %155 : vector<10x128xf32>
    %157 = arith.addf %151, %156 : vector<10x128xf32>
    %158 = vector.extract_strided_slice %112 {offsets = [0, 7], sizes = [10, 1], strides = [1, 1]} : vector<10x16xf32> to vector<10x1xf32>
    %159 = vector.extract_strided_slice %111 {offsets = [7, 0], sizes = [1, 128], strides = [1, 1]} : vector<16x128xf32> to vector<1x128xf32>
    %160 = vector.broadcast %158 : vector<10x1xf32> to vector<10x128xf32>
    %161 = vector.broadcast %159 : vector<1x128xf32> to vector<10x128xf32>
    %162 = arith.mulf %160, %161 : vector<10x128xf32>
    %163 = arith.addf %157, %162 : vector<10x128xf32>
    %164 = vector.extract_strided_slice %112 {offsets = [0, 8], sizes = [10, 1], strides = [1, 1]} : vector<10x16xf32> to vector<10x1xf32>
    %165 = vector.extract_strided_slice %111 {offsets = [8, 0], sizes = [1, 128], strides = [1, 1]} : vector<16x128xf32> to vector<1x128xf32>
    %166 = vector.broadcast %164 : vector<10x1xf32> to vector<10x128xf32>
    %167 = vector.broadcast %165 : vector<1x128xf32> to vector<10x128xf32>
    %168 = arith.mulf %166, %167 : vector<10x128xf32>
    %169 = arith.addf %163, %168 : vector<10x128xf32>
    %170 = vector.extract_strided_slice %112 {offsets = [0, 9], sizes = [10, 1], strides = [1, 1]} : vector<10x16xf32> to vector<10x1xf32>
    %171 = vector.extract_strided_slice %111 {offsets = [9, 0], sizes = [1, 128], strides = [1, 1]} : vector<16x128xf32> to vector<1x128xf32>
    %172 = vector.broadcast %170 : vector<10x1xf32> to vector<10x128xf32>
    %173 = vector.broadcast %171 : vector<1x128xf32> to vector<10x128xf32>
    %174 = arith.mulf %172, %173 : vector<10x128xf32>
    %175 = arith.addf %169, %174 : vector<10x128xf32>
    %176 = vector.extract_strided_slice %112 {offsets = [0, 10], sizes = [10, 1], strides = [1, 1]} : vector<10x16xf32> to vector<10x1xf32>
    %177 = vector.extract_strided_slice %111 {offsets = [10, 0], sizes = [1, 128], strides = [1, 1]} : vector<16x128xf32> to vector<1x128xf32>
    %178 = vector.broadcast %176 : vector<10x1xf32> to vector<10x128xf32>
    %179 = vector.broadcast %177 : vector<1x128xf32> to vector<10x128xf32>
    %180 = arith.mulf %178, %179 : vector<10x128xf32>
    %181 = arith.addf %175, %180 : vector<10x128xf32>
    %182 = vector.extract_strided_slice %112 {offsets = [0, 11], sizes = [10, 1], strides = [1, 1]} : vector<10x16xf32> to vector<10x1xf32>
    %183 = vector.extract_strided_slice %111 {offsets = [11, 0], sizes = [1, 128], strides = [1, 1]} : vector<16x128xf32> to vector<1x128xf32>
    %184 = vector.broadcast %182 : vector<10x1xf32> to vector<10x128xf32>
    %185 = vector.broadcast %183 : vector<1x128xf32> to vector<10x128xf32>
    %186 = arith.mulf %184, %185 : vector<10x128xf32>
    %187 = arith.addf %181, %186 : vector<10x128xf32>
    %188 = vector.extract_strided_slice %112 {offsets = [0, 12], sizes = [10, 1], strides = [1, 1]} : vector<10x16xf32> to vector<10x1xf32>
    %189 = vector.extract_strided_slice %111 {offsets = [12, 0], sizes = [1, 128], strides = [1, 1]} : vector<16x128xf32> to vector<1x128xf32>
    %190 = vector.broadcast %188 : vector<10x1xf32> to vector<10x128xf32>
    %191 = vector.broadcast %189 : vector<1x128xf32> to vector<10x128xf32>
    %192 = arith.mulf %190, %191 : vector<10x128xf32>
    %193 = arith.addf %187, %192 : vector<10x128xf32>
    %194 = vector.extract_strided_slice %112 {offsets = [0, 13], sizes = [10, 1], strides = [1, 1]} : vector<10x16xf32> to vector<10x1xf32>
    %195 = vector.extract_strided_slice %111 {offsets = [13, 0], sizes = [1, 128], strides = [1, 1]} : vector<16x128xf32> to vector<1x128xf32>
    %196 = vector.broadcast %194 : vector<10x1xf32> to vector<10x128xf32>
    %197 = vector.broadcast %195 : vector<1x128xf32> to vector<10x128xf32>
    %198 = arith.mulf %196, %197 : vector<10x128xf32>
    %199 = arith.addf %193, %198 : vector<10x128xf32>
    %200 = vector.extract_strided_slice %112 {offsets = [0, 14], sizes = [10, 1], strides = [1, 1]} : vector<10x16xf32> to vector<10x1xf32>
    %201 = vector.extract_strided_slice %111 {offsets = [14, 0], sizes = [1, 128], strides = [1, 1]} : vector<16x128xf32> to vector<1x128xf32>
    %202 = vector.broadcast %200 : vector<10x1xf32> to vector<10x128xf32>
    %203 = vector.broadcast %201 : vector<1x128xf32> to vector<10x128xf32>
    %204 = arith.mulf %202, %203 : vector<10x128xf32>
    %205 = arith.addf %199, %204 : vector<10x128xf32>
    %206 = vector.extract_strided_slice %112 {offsets = [0, 15], sizes = [10, 1], strides = [1, 1]} : vector<10x16xf32> to vector<10x1xf32>
    %207 = vector.extract_strided_slice %111 {offsets = [15, 0], sizes = [1, 128], strides = [1, 1]} : vector<16x128xf32> to vector<1x128xf32>
    %208 = vector.broadcast %206 : vector<10x1xf32> to vector<10x128xf32>
    %209 = vector.broadcast %207 : vector<1x128xf32> to vector<10x128xf32>
    %210 = arith.mulf %208, %209 : vector<10x128xf32>
    %211 = arith.addf %205, %210 : vector<10x128xf32>
    %212 = math.tanh %211 : vector<10x128xf32>
    %c0_17 = arith.constant 0 : index
    %c0_18 = arith.constant 0 : index
    %213 = vector.load %arg10[%c0_17, %c0_18] : memref<4x10xf32, #tpu.memory_space<vmem>>, vector<4x10xf32>
    %c0_19 = arith.constant 0 : index
    %c0_20 = arith.constant 0 : index
    %214 = vector.load %arg11[%c0_19, %c0_20] : memref<4x1xf32, #tpu.memory_space<vmem>>, vector<4x1xf32>
    %215 = vector.shape_cast %214 : vector<4x1xf32> to vector<4x1xf32>
    %216 = vector.broadcast %215 : vector<4x1xf32> to vector<4x128xf32>
    %217 = vector.extract_strided_slice %213 {offsets = [0, 0], sizes = [4, 1], strides = [1, 1]} : vector<4x10xf32> to vector<4x1xf32>
    %218 = vector.extract_strided_slice %212 {offsets = [0, 0], sizes = [1, 128], strides = [1, 1]} : vector<10x128xf32> to vector<1x128xf32>
    %219 = vector.broadcast %217 : vector<4x1xf32> to vector<4x128xf32>
    %220 = vector.broadcast %218 : vector<1x128xf32> to vector<4x128xf32>
    %221 = arith.mulf %219, %220 : vector<4x128xf32>
    %222 = arith.addf %216, %221 : vector<4x128xf32>
    %223 = vector.extract_strided_slice %213 {offsets = [0, 1], sizes = [4, 1], strides = [1, 1]} : vector<4x10xf32> to vector<4x1xf32>
    %224 = vector.extract_strided_slice %212 {offsets = [1, 0], sizes = [1, 128], strides = [1, 1]} : vector<10x128xf32> to vector<1x128xf32>
    %225 = vector.broadcast %223 : vector<4x1xf32> to vector<4x128xf32>
    %226 = vector.broadcast %224 : vector<1x128xf32> to vector<4x128xf32>
    %227 = arith.mulf %225, %226 : vector<4x128xf32>
    %228 = arith.addf %222, %227 : vector<4x128xf32>
    %229 = vector.extract_strided_slice %213 {offsets = [0, 2], sizes = [4, 1], strides = [1, 1]} : vector<4x10xf32> to vector<4x1xf32>
    %230 = vector.extract_strided_slice %212 {offsets = [2, 0], sizes = [1, 128], strides = [1, 1]} : vector<10x128xf32> to vector<1x128xf32>
    %231 = vector.broadcast %229 : vector<4x1xf32> to vector<4x128xf32>
    %232 = vector.broadcast %230 : vector<1x128xf32> to vector<4x128xf32>
    %233 = arith.mulf %231, %232 : vector<4x128xf32>
    %234 = arith.addf %228, %233 : vector<4x128xf32>
    %235 = vector.extract_strided_slice %213 {offsets = [0, 3], sizes = [4, 1], strides = [1, 1]} : vector<4x10xf32> to vector<4x1xf32>
    %236 = vector.extract_strided_slice %212 {offsets = [3, 0], sizes = [1, 128], strides = [1, 1]} : vector<10x128xf32> to vector<1x128xf32>
    %237 = vector.broadcast %235 : vector<4x1xf32> to vector<4x128xf32>
    %238 = vector.broadcast %236 : vector<1x128xf32> to vector<4x128xf32>
    %239 = arith.mulf %237, %238 : vector<4x128xf32>
    %240 = arith.addf %234, %239 : vector<4x128xf32>
    %241 = vector.extract_strided_slice %213 {offsets = [0, 4], sizes = [4, 1], strides = [1, 1]} : vector<4x10xf32> to vector<4x1xf32>
    %242 = vector.extract_strided_slice %212 {offsets = [4, 0], sizes = [1, 128], strides = [1, 1]} : vector<10x128xf32> to vector<1x128xf32>
    %243 = vector.broadcast %241 : vector<4x1xf32> to vector<4x128xf32>
    %244 = vector.broadcast %242 : vector<1x128xf32> to vector<4x128xf32>
    %245 = arith.mulf %243, %244 : vector<4x128xf32>
    %246 = arith.addf %240, %245 : vector<4x128xf32>
    %247 = vector.extract_strided_slice %213 {offsets = [0, 5], sizes = [4, 1], strides = [1, 1]} : vector<4x10xf32> to vector<4x1xf32>
    %248 = vector.extract_strided_slice %212 {offsets = [5, 0], sizes = [1, 128], strides = [1, 1]} : vector<10x128xf32> to vector<1x128xf32>
    %249 = vector.broadcast %247 : vector<4x1xf32> to vector<4x128xf32>
    %250 = vector.broadcast %248 : vector<1x128xf32> to vector<4x128xf32>
    %251 = arith.mulf %249, %250 : vector<4x128xf32>
    %252 = arith.addf %246, %251 : vector<4x128xf32>
    %253 = vector.extract_strided_slice %213 {offsets = [0, 6], sizes = [4, 1], strides = [1, 1]} : vector<4x10xf32> to vector<4x1xf32>
    %254 = vector.extract_strided_slice %212 {offsets = [6, 0], sizes = [1, 128], strides = [1, 1]} : vector<10x128xf32> to vector<1x128xf32>
    %255 = vector.broadcast %253 : vector<4x1xf32> to vector<4x128xf32>
    %256 = vector.broadcast %254 : vector<1x128xf32> to vector<4x128xf32>
    %257 = arith.mulf %255, %256 : vector<4x128xf32>
    %258 = arith.addf %252, %257 : vector<4x128xf32>
    %259 = vector.extract_strided_slice %213 {offsets = [0, 7], sizes = [4, 1], strides = [1, 1]} : vector<4x10xf32> to vector<4x1xf32>
    %260 = vector.extract_strided_slice %212 {offsets = [7, 0], sizes = [1, 128], strides = [1, 1]} : vector<10x128xf32> to vector<1x128xf32>
    %261 = vector.broadcast %259 : vector<4x1xf32> to vector<4x128xf32>
    %262 = vector.broadcast %260 : vector<1x128xf32> to vector<4x128xf32>
    %263 = arith.mulf %261, %262 : vector<4x128xf32>
    %264 = arith.addf %258, %263 : vector<4x128xf32>
    %265 = vector.extract_strided_slice %213 {offsets = [0, 8], sizes = [4, 1], strides = [1, 1]} : vector<4x10xf32> to vector<4x1xf32>
    %266 = vector.extract_strided_slice %212 {offsets = [8, 0], sizes = [1, 128], strides = [1, 1]} : vector<10x128xf32> to vector<1x128xf32>
    %267 = vector.broadcast %265 : vector<4x1xf32> to vector<4x128xf32>
    %268 = vector.broadcast %266 : vector<1x128xf32> to vector<4x128xf32>
    %269 = arith.mulf %267, %268 : vector<4x128xf32>
    %270 = arith.addf %264, %269 : vector<4x128xf32>
    %271 = vector.extract_strided_slice %213 {offsets = [0, 9], sizes = [4, 1], strides = [1, 1]} : vector<4x10xf32> to vector<4x1xf32>
    %272 = vector.extract_strided_slice %212 {offsets = [9, 0], sizes = [1, 128], strides = [1, 1]} : vector<10x128xf32> to vector<1x128xf32>
    %273 = vector.broadcast %271 : vector<4x1xf32> to vector<4x128xf32>
    %274 = vector.broadcast %272 : vector<1x128xf32> to vector<4x128xf32>
    %275 = arith.mulf %273, %274 : vector<4x128xf32>
    %276 = arith.addf %270, %275 : vector<4x128xf32>
    %277 = math.tanh %276 : vector<4x128xf32>
    %c0_21 = arith.constant 0 : index
    %c0_22 = arith.constant 0 : index
    %278 = vector.load %arg12[%c0_21, %c0_22] : memref<2x4xf32, #tpu.memory_space<vmem>>, vector<2x4xf32>
    %c0_23 = arith.constant 0 : index
    %c0_24 = arith.constant 0 : index
    %279 = vector.load %arg13[%c0_23, %c0_24] : memref<2x1xf32, #tpu.memory_space<vmem>>, vector<2x1xf32>
    %280 = vector.shape_cast %279 : vector<2x1xf32> to vector<2x1xf32>
    %281 = vector.broadcast %280 : vector<2x1xf32> to vector<2x128xf32>
    %282 = vector.extract_strided_slice %278 {offsets = [0, 0], sizes = [2, 1], strides = [1, 1]} : vector<2x4xf32> to vector<2x1xf32>
    %283 = vector.extract_strided_slice %277 {offsets = [0, 0], sizes = [1, 128], strides = [1, 1]} : vector<4x128xf32> to vector<1x128xf32>
    %284 = vector.broadcast %282 : vector<2x1xf32> to vector<2x128xf32>
    %285 = vector.broadcast %283 : vector<1x128xf32> to vector<2x128xf32>
    %286 = arith.mulf %284, %285 : vector<2x128xf32>
    %287 = arith.addf %281, %286 : vector<2x128xf32>
    %288 = vector.extract_strided_slice %278 {offsets = [0, 1], sizes = [2, 1], strides = [1, 1]} : vector<2x4xf32> to vector<2x1xf32>
    %289 = vector.extract_strided_slice %277 {offsets = [1, 0], sizes = [1, 128], strides = [1, 1]} : vector<4x128xf32> to vector<1x128xf32>
    %290 = vector.broadcast %288 : vector<2x1xf32> to vector<2x128xf32>
    %291 = vector.broadcast %289 : vector<1x128xf32> to vector<2x128xf32>
    %292 = arith.mulf %290, %291 : vector<2x128xf32>
    %293 = arith.addf %287, %292 : vector<2x128xf32>
    %294 = vector.extract_strided_slice %278 {offsets = [0, 2], sizes = [2, 1], strides = [1, 1]} : vector<2x4xf32> to vector<2x1xf32>
    %295 = vector.extract_strided_slice %277 {offsets = [2, 0], sizes = [1, 128], strides = [1, 1]} : vector<4x128xf32> to vector<1x128xf32>
    %296 = vector.broadcast %294 : vector<2x1xf32> to vector<2x128xf32>
    %297 = vector.broadcast %295 : vector<1x128xf32> to vector<2x128xf32>
    %298 = arith.mulf %296, %297 : vector<2x128xf32>
    %299 = arith.addf %293, %298 : vector<2x128xf32>
    %300 = vector.extract_strided_slice %278 {offsets = [0, 3], sizes = [2, 1], strides = [1, 1]} : vector<2x4xf32> to vector<2x1xf32>
    %301 = vector.extract_strided_slice %277 {offsets = [3, 0], sizes = [1, 128], strides = [1, 1]} : vector<4x128xf32> to vector<1x128xf32>
    %302 = vector.broadcast %300 : vector<2x1xf32> to vector<2x128xf32>
    %303 = vector.broadcast %301 : vector<1x128xf32> to vector<2x128xf32>
    %304 = arith.mulf %302, %303 : vector<2x128xf32>
    %305 = arith.addf %299, %304 : vector<2x128xf32>
    %c0_25 = arith.constant 0 : index
    %c0_26 = arith.constant 0 : index
    %306 = vector.load %arg14[%c0_25, %c0_26] : memref<2x128xf32, #tpu.memory_space<vmem>>, vector<2x128xf32>
    tpu.vector_store %arg14[%c0_25, %c0_26], %305 {strides = array<i32>} : memref<2x128xf32, #tpu.memory_space<vmem>>, vector<2x128xf32>,
    return
  }
  func.func @transform_0(%arg0: i32) -> (i32, i32) {
    %c0_i32 = arith.constant 0 : i32
    %c0_i32_0 = arith.constant 0 : i32
    return %c0_i32, %arg0 : i32, i32
  }
  func.func @transform_1(%arg0: i32) -> (i32, i32) {
    %c0_i32 = arith.constant 0 : i32
    %c0_i32_0 = arith.constant 0 : i32
    %c0_i32_1 = arith.constant 0 : i32
    return %c0_i32, %c0_i32_0 : i32, i32
  }
  func.func @transform_2(%arg0: i32) -> (i32, i32) {
    %c0_i32 = arith.constant 0 : i32
    %c0_i32_0 = arith.constant 0 : i32
    %c0_i32_1 = arith.constant 0 : i32
    return %c0_i32, %c0_i32_0 : i32, i32
  }
  func.func @transform_3(%arg0: i32) -> (i32, i32) {
    %c0_i32 = arith.constant 0 : i32
    %c0_i32_0 = arith.constant 0 : i32
    %c0_i32_1 = arith.constant 0 : i32
    return %c0_i32, %c0_i32_0 : i32, i32
  }
  func.func @transform_4(%arg0: i32) -> (i32, i32) {
    %c0_i32 = arith.constant 0 : i32
    %c0_i32_0 = arith.constant 0 : i32
    %c0_i32_1 = arith.constant 0 : i32
    return %c0_i32, %c0_i32_0 : i32, i32
  }
  func.func @transform_5(%arg0: i32) -> (i32, i32) {
    %c0_i32 = arith.constant 0 : i32
    %c0_i32_0 = arith.constant 0 : i32
    %c0_i32_1 = arith.constant 0 : i32
    return %c0_i32, %c0_i32_0 : i32, i32
  }
  func.func @transform_6(%arg0: i32) -> (i32, i32) {
    %c0_i32 = arith.constant 0 : i32
    %c0_i32_0 = arith.constant 0 : i32
    %c0_i32_1 = arith.constant 0 : i32
    return %c0_i32, %c0_i32_0 : i32, i32
  }
  func.func @transform_7(%arg0: i32) -> (i32, i32) {
    %c0_i32 = arith.constant 0 : i32
    %c0_i32_0 = arith.constant 0 : i32
    %c0_i32_1 = arith.constant 0 : i32
    return %c0_i32, %c0_i32_0 : i32, i32
  }
  func.func @transform_8(%arg0: i32) -> (i32, i32) {
    %c0_i32 = arith.constant 0 : i32
    %c0_i32_0 = arith.constant 0 : i32
    %c0_i32_1 = arith.constant 0 : i32
    return %c0_i32, %c0_i32_0 : i32, i32
  }
  func.func @transform_9(%arg0: i32) -> (i32, i32) {
    %c0_i32 = arith.constant 0 : i32
    %c0_i32_0 = arith.constant 0 : i32
    %c0_i32_1 = arith.constant 0 : i32
    return %c0_i32, %c0_i32_0 : i32, i32
  }
  func.func @transform_10(%arg0: i32) -> (i32, i32) {
    %c0_i32 = arith.constant 0 : i32
    %c0_i32_0 = arith.constant 0 : i32
    %c0_i32_1 = arith.constant 0 : i32
    return %c0_i32, %c0_i32_0 : i32, i32
  }
  func.func @transform_11(%arg0: i32) -> (i32, i32) {
    %c0_i32 = arith.constant 0 : i32
    %c0_i32_0 = arith.constant 0 : i32
    %c0_i32_1 = arith.constant 0 : i32
    return %c0_i32, %c0_i32_0 : i32, i32
  }
  func.func @transform_12(%arg0: i32) -> (i32, i32) {
    %c0_i32 = arith.constant 0 : i32
    %c0_i32_0 = arith.constant 0 : i32
    %c0_i32_1 = arith.constant 0 : i32
    return %c0_i32, %c0_i32_0 : i32, i32
  }
  func.func @transform_13(%arg0: i32) -> (i32, i32) {
    %c0_i32 = arith.constant 0 : i32
    %c0_i32_0 = arith.constant 0 : i32
    return %c0_i32, %arg0 : i32, i32
  }
}

</mosaic_0001>

<llo_original>
// kernel: tpu_custom_call.1
$region0: #{tpu_custom_call.1}
  #allocation0 [shape = 'u32[]', space=smem, size = 0x4, offset = 0x4, fixed_abs, tag = 'smem constant byte address 0x4 - core index']
  #allocation1 [shape = 'u32[144,128]{1,0:T(1,128)}', space=vmem, size = 0x12000, scoped, tag = 'internal scratch']
  %s0 = inlined_call_operand.vmem [shape: f32[2,128], index: 0, kind: input, shape index: {}]
  %s1 = inlined_call_operand.vmem [shape: f32[4,2], index: 1, kind: input, shape index: {}]
  %s2 = inlined_call_operand.vmem [shape: f32[4,1], index: 2, kind: input, shape index: {}]
  %s3 = inlined_call_operand.vmem [shape: f32[10,4], index: 3, kind: input, shape index: {}]
  %s4 = inlined_call_operand.vmem [shape: f32[10,1], index: 4, kind: input, shape index: {}]
  %s5 = inlined_call_operand.vmem [shape: f32[16,10], index: 5, kind: input, shape index: {}]
  %s6 = inlined_call_operand.vmem [shape: f32[16,1], index: 6, kind: input, shape index: {}]
  %s7 = inlined_call_operand.vmem [shape: f32[10,16], index: 7, kind: input, shape index: {}]
  %s8 = inlined_call_operand.vmem [shape: f32[10,1], index: 8, kind: input, shape index: {}]
  %s9 = inlined_call_operand.vmem [shape: f32[4,10], index: 9, kind: input, shape index: {}]
  %s10 = inlined_call_operand.vmem [shape: f32[4,1], index: 10, kind: input, shape index: {}]
  %s11 = inlined_call_operand.vmem [shape: f32[2,4], index: 11, kind: input, shape index: {}]
  %s12 = inlined_call_operand.vmem [shape: f32[2,1], index: 12, kind: input, shape index: {}]
  %s13 = inlined_call_operand.hbm [shape: f32[2,128], index: 13, kind: output, shape index: {}]
  %s14 = sld [smem:[#allocation0]]
  $region62: #{tpu_custom_call.1} parent=0
    _
  %s16 = ssub.s32 1, %s14
  %s17 = scalar_select 0, %s16, %s14
  $region1: #{tpu_custom_call.1} parent=0
    #allocation2 [shape = 'u8[1024]{0}', space=vmem, size = 0x400, scoped, tag = 'output window, operand 0, single buffered']
    #allocation3 [shape = 's32[1]{0}', space=sflag, size = 0x4, scoped, tag = 'scoped memory for tpu_custom_call.1']
    %18 = vsyncpa [#allocation3], 0
    // Predicated region
    $region2: #{tpu_custom_call.1} parent=1 // pred_check
      _
    $region3: #{tpu_custom_call.1} parent=1 // pred_check_branch
      %20 = sbr.rel (0) target = $region5
    $region4: #{tpu_custom_call.1} parent=1 // pred_region
      _
    $region5: #{tpu_custom_call.1} parent=1 // pred_fallthru
      _
    // Predicated region
    $region6: #{tpu_custom_call.1} parent=1 // pred_check
      _
    $region7: #{tpu_custom_call.1} parent=1 // pred_check_branch
      %22 = sbr.rel (0) target = $region9
    $region8: #{tpu_custom_call.1} parent=1 // pred_region
      _
    $region9: #{tpu_custom_call.1} parent=1 // pred_fallthru
      _
    // Predicated region
    $region10: #{tpu_custom_call.1} parent=1 // pred_check
      _
    $region11: #{tpu_custom_call.1} parent=1 // pred_check_branch
      %24 = sbr.rel (0) target = $region13
    $region12: #{tpu_custom_call.1} parent=1 // pred_region
      _
    $region13: #{tpu_custom_call.1} parent=1 // pred_fallthru
      _
    // Predicated region
    $region14: #{tpu_custom_call.1} parent=1 // pred_check
      _
    $region15: #{tpu_custom_call.1} parent=1 // pred_check_branch
      %26 = sbr.rel (0) target = $region17
    $region16: #{tpu_custom_call.1} parent=1 // pred_region
      _
    $region17: #{tpu_custom_call.1} parent=1 // pred_fallthru
      _
    // Predicated region
    $region18: #{tpu_custom_call.1} parent=1 // pred_check
      _
    $region19: #{tpu_custom_call.1} parent=1 // pred_check_branch
      %28 = sbr.rel (0) target = $region21
    $region20: #{tpu_custom_call.1} parent=1 // pred_region
      _
    $region21: #{tpu_custom_call.1} parent=1 // pred_fallthru
      _
    // Predicated region
    $region22: #{tpu_custom_call.1} parent=1 // pred_check
      _
    $region23: #{tpu_custom_call.1} parent=1 // pred_check_branch
      %30 = sbr.rel (0) target = $region25
    $region24: #{tpu_custom_call.1} parent=1 // pred_region
      _
    $region25: #{tpu_custom_call.1} parent=1 // pred_fallthru
      _
    // Predicated region
    $region26: #{tpu_custom_call.1} parent=1 // pred_check
      _
    $region27: #{tpu_custom_call.1} parent=1 // pred_check_branch
      %32 = sbr.rel (0) target = $region29
    $region28: #{tpu_custom_call.1} parent=1 // pred_region
      _
    $region29: #{tpu_custom_call.1} parent=1 // pred_fallthru
      _
    // Predicated region
    $region30: #{tpu_custom_call.1} parent=1 // pred_check
      _
    $region31: #{tpu_custom_call.1} parent=1 // pred_check_branch
      %34 = sbr.rel (0) target = $region33
    $region32: #{tpu_custom_call.1} parent=1 // pred_region
      _
    $region33: #{tpu_custom_call.1} parent=1 // pred_fallthru
      _
    // Predicated region
    $region34: #{tpu_custom_call.1} parent=1 // pred_check
      _
    $region35: #{tpu_custom_call.1} parent=1 // pred_check_branch
      %36 = sbr.rel (0) target = $region37
    $region36: #{tpu_custom_call.1} parent=1 // pred_region
      _
    $region37: #{tpu_custom_call.1} parent=1 // pred_fallthru
      _
    // Predicated region
    $region38: #{tpu_custom_call.1} parent=1 // pred_check
      _
    $region39: #{tpu_custom_call.1} parent=1 // pred_check_branch
      %38 = sbr.rel (0) target = $region41
    $region40: #{tpu_custom_call.1} parent=1 // pred_region
      _
    $region41: #{tpu_custom_call.1} parent=1 // pred_fallthru
      _
    // Predicated region
    $region42: #{tpu_custom_call.1} parent=1 // pred_check
      _
    $region43: #{tpu_custom_call.1} parent=1 // pred_check_branch
      %40 = sbr.rel (0) target = $region45
    $region44: #{tpu_custom_call.1} parent=1 // pred_region
      _
    $region45: #{tpu_custom_call.1} parent=1 // pred_fallthru
      _
    // Predicated region
    $region46: #{tpu_custom_call.1} parent=1 // pred_check
      _
    $region47: #{tpu_custom_call.1} parent=1 // pred_check_branch
      %42 = sbr.rel (0) target = $region49
    $region48: #{tpu_custom_call.1} parent=1 // pred_region
      _
    $region49: #{tpu_custom_call.1} parent=1 // pred_fallthru
      _
    // Predicated region
    $region50: #{tpu_custom_call.1} parent=1 // pred_check
      _
    $region51: #{tpu_custom_call.1} parent=1 // pred_check_branch
      %44 = sbr.rel (0) target = $region53
    $region52: #{tpu_custom_call.1} parent=1 // pred_region
      _
    $region53: #{tpu_custom_call.1} parent=1 // pred_fallthru
      _
    %v45 = vld [vmem:[%s0] sm:$0x3]
    %v46 = vld [vmem:[%s1] sm:$0xf]
    %v47 = vld [vmem:[%s2] sm:$0xf]
    %49 = vset.pattern.permute.xlu0 0
    %50 = vperm.xlu0 %49, %v47
    %v51 = vpop.permute.xlu0 %50
    %54 = vset.pattern.permute.xlu0 0
    %55 = vperm.xlu0 %54, %v46
    %v56 = vpop.permute.xlu0 %55
    %v58 = vlaneseq
    %v59 = vshrl.u32 %v58, 7
    %v60 = vsub.s32 0, %v59
    %v61 = vrot.slane %v45, %v60
    %v62 = vmul.f32 %v56, %v61
    %v63 = vadd.f32 %v51, %v62
    %64 = vset.pattern.permute.xlu0 1
    %65 = vperm.xlu0 %64, %v46
    %v66 = vpop.permute.xlu0 %65
    %v68 = vlaneseq
    %v69 = vshrl.u32 %v68, 7
    %v70 = vsub.s32 1, %v69
    %v71 = vrot.slane %v45, %v70
    %v72 = vmul.f32 %v66, %v71
    %v73 = vadd.f32 %v63, %v72
    %v74 = vtanh.pop %v73
    %v75 = vld [vmem:[%s3] sm:$0xff]
    %v76 = vld [vmem:[%s3 + $0x8] sm:$0x3]
    %v77 = vld [vmem:[%s4] sm:$0xff]
    %v78 = vld [vmem:[%s4 + $0x8] sm:$0x3]
    %80 = vset.pattern.permute.xlu0 0
    %81 = vperm.xlu0 %80, %v77
    %v82 = vpop.permute.xlu0 %81
    %85 = vset.pattern.permute.xlu0 0
    %86 = vperm.xlu0 %85, %v78
    %v87 = vpop.permute.xlu0 %86
    %90 = vset.pattern.permute.xlu0 0
    %91 = vperm.xlu0 %90, %v75
    %v92 = vpop.permute.xlu0 %91
    %95 = vset.pattern.permute.xlu0 0
    %96 = vperm.xlu0 %95, %v76
    %v97 = vpop.permute.xlu0 %96
    %v99 = vlaneseq
    %v100 = vshrl.u32 %v99, 7
    %v101 = vsub.s32 0, %v100
    %v102 = vrot.slane %v74, %v101
    %v103 = vmul.f32 %v92, %v102
    %v104 = vmul.f32 %v97, %v102
    %v105 = vadd.f32 %v82, %v103
    %v106 = vadd.f32 %v87, %v104
    %107 = vset.pattern.permute.xlu0 1
    %108 = vperm.xlu0 %107, %v75
    %v109 = vpop.permute.xlu0 %108
    %111 = vset.pattern.permute.xlu0 1
    %112 = vperm.xlu0 %111, %v76
    %v113 = vpop.permute.xlu0 %112
    %v115 = vlaneseq
    %v116 = vshrl.u32 %v115, 7
    %v117 = vsub.s32 1, %v116
    %v118 = vrot.slane %v74, %v117
    %v119 = vmul.f32 %v109, %v118
    %v120 = vmul.f32 %v113, %v118
    %v121 = vadd.f32 %v105, %v119
    %v122 = vadd.f32 %v106, %v120
    %123 = vset.pattern.permute.xlu0 2
    %124 = vperm.xlu0 %123, %v75
    %v125 = vpop.permute.xlu0 %124
    %127 = vset.pattern.permute.xlu0 2
    %128 = vperm.xlu0 %127, %v76
    %v129 = vpop.permute.xlu0 %128
    %v131 = vlaneseq
    %v132 = vshrl.u32 %v131, 7
    %v133 = vsub.s32 2, %v132
    %v134 = vrot.slane %v74, %v133
    %v135 = vmul.f32 %v125, %v134
    %v136 = vmul.f32 %v129, %v134
    %v137 = vadd.f32 %v121, %v135
    %v138 = vadd.f32 %v122, %v136
    %139 = vset.pattern.permute.xlu0 3
    %140 = vperm.xlu0 %139, %v75
    %v141 = vpop.permute.xlu0 %140
    %143 = vset.pattern.permute.xlu0 3
    %144 = vperm.xlu0 %143, %v76
    %v145 = vpop.permute.xlu0 %144
    %v147 = vlaneseq
    %v148 = vshrl.u32 %v147, 7
    %v149 = vsub.s32 3, %v148
    %v150 = vrot.slane %v74, %v149
    %v151 = vmul.f32 %v141, %v150
    %v152 = vmul.f32 %v145, %v150
    %v153 = vadd.f32 %v137, %v151
    %v154 = vadd.f32 %v138, %v152
    %v155 = vtanh.pop %v153
    %v156 = vtanh.pop %v154
    %v157 = vld [vmem:[%s5] sm:$0xff]
    %v158 = vld [vmem:[%s5 + $0x8] sm:$0xff]
    %v159 = vld [vmem:[%s6] sm:$0xff]
    %v160 = vld [vmem:[%s6 + $0x8] sm:$0xff]
    %162 = vset.pattern.permute.xlu0 0
    %163 = vperm.xlu0 %162, %v159
    %v164 = vpop.permute.xlu0 %163
    %167 = vset.pattern.permute.xlu0 0
    %168 = vperm.xlu0 %167, %v160
    %v169 = vpop.permute.xlu0 %168
    %172 = vset.pattern.permute.xlu0 0
    %173 = vperm.xlu0 %172, %v157
    %v174 = vpop.permute.xlu0 %173
    %177 = vset.pattern.permute.xlu0 0
    %178 = vperm.xlu0 %177, %v158
    %v179 = vpop.permute.xlu0 %178
    %v181 = vlaneseq
    %v182 = vshrl.u32 %v181, 7
    %v183 = vsub.s32 0, %v182
    %v184 = vrot.slane %v155, %v183
    %v185 = vmul.f32 %v174, %v184
    %v186 = vmul.f32 %v179, %v184
    %v187 = vadd.f32 %v164, %v185
    %v188 = vadd.f32 %v169, %v186
    %189 = vset.pattern.permute.xlu0 1
    %190 = vperm.xlu0 %189, %v157
    %v191 = vpop.permute.xlu0 %190
    %193 = vset.pattern.permute.xlu0 1
    %194 = vperm.xlu0 %193, %v158
    %v195 = vpop.permute.xlu0 %194
    %v197 = vlaneseq
    %v198 = vshrl.u32 %v197, 7
    %v199 = vsub.s32 1, %v198
    %v200 = vrot.slane %v155, %v199
    %v201 = vmul.f32 %v191, %v200
    %v202 = vmul.f32 %v195, %v200
    %v203 = vadd.f32 %v187, %v201
    %v204 = vadd.f32 %v188, %v202
    %205 = vset.pattern.permute.xlu0 2
    %206 = vperm.xlu0 %205, %v157
    %v207 = vpop.permute.xlu0 %206
    %209 = vset.pattern.permute.xlu0 2
    %210 = vperm.xlu0 %209, %v158
    %v211 = vpop.permute.xlu0 %210
    %v213 = vlaneseq
    %v214 = vshrl.u32 %v213, 7
    %v215 = vsub.s32 2, %v214
    %v216 = vrot.slane %v155, %v215
    %v217 = vmul.f32 %v207, %v216
    %v218 = vmul.f32 %v211, %v216
    %v219 = vadd.f32 %v203, %v217
    %v220 = vadd.f32 %v204, %v218
    %221 = vset.pattern.permute.xlu0 3
    %222 = vperm.xlu0 %221, %v157
    %v223 = vpop.permute.xlu0 %222
    %225 = vset.pattern.permute.xlu0 3
    %226 = vperm.xlu0 %225, %v158
    %v227 = vpop.permute.xlu0 %226
    %v229 = vlaneseq
    %v230 = vshrl.u32 %v229, 7
    %v231 = vsub.s32 3, %v230
    %v232 = vrot.slane %v155, %v231
    %v233 = vmul.f32 %v223, %v232
    %v234 = vmul.f32 %v227, %v232
    %v235 = vadd.f32 %v219, %v233
    %v236 = vadd.f32 %v220, %v234
    %237 = vset.pattern.permute.xlu0 4
    %238 = vperm.xlu0 %237, %v157
    %v239 = vpop.permute.xlu0 %238
    %241 = vset.pattern.permute.xlu0 4
    %242 = vperm.xlu0 %241, %v158
    %v243 = vpop.permute.xlu0 %242
    %v245 = vlaneseq
    %v246 = vshrl.u32 %v245, 7
    %v247 = vsub.s32 4, %v246
    %v248 = vrot.slane %v155, %v247
    %v249 = vmul.f32 %v239, %v248
    %v250 = vmul.f32 %v243, %v248
    %v251 = vadd.f32 %v235, %v249
    %v252 = vadd.f32 %v236, %v250
    %253 = vset.pattern.permute.xlu0 5
    %254 = vperm.xlu0 %253, %v157
    %v255 = vpop.permute.xlu0 %254
    %257 = vset.pattern.permute.xlu0 5
    %258 = vperm.xlu0 %257, %v158
    %v259 = vpop.permute.xlu0 %258
    %v261 = vlaneseq
    %v262 = vshrl.u32 %v261, 7
    %v263 = vsub.s32 5, %v262
    %v264 = vrot.slane %v155, %v263
    %v265 = vmul.f32 %v255, %v264
    %v266 = vmul.f32 %v259, %v264
    %v267 = vadd.f32 %v251, %v265
    %v268 = vadd.f32 %v252, %v266
    %269 = vset.pattern.permute.xlu0 6
    %270 = vperm.xlu0 %269, %v157
    %v271 = vpop.permute.xlu0 %270
    %273 = vset.pattern.permute.xlu0 6
    %274 = vperm.xlu0 %273, %v158
    %v275 = vpop.permute.xlu0 %274
    %v277 = vlaneseq
    %v278 = vshrl.u32 %v277, 7
    %v279 = vsub.s32 6, %v278
    %v280 = vrot.slane %v155, %v279
    %v281 = vmul.f32 %v271, %v280
    %v282 = vmul.f32 %v275, %v280
    %v283 = vadd.f32 %v267, %v281
    %v284 = vadd.f32 %v268, %v282
    %285 = vset.pattern.permute.xlu0 7
    %286 = vperm.xlu0 %285, %v157
    %v287 = vpop.permute.xlu0 %286
    %289 = vset.pattern.permute.xlu0 7
    %290 = vperm.xlu0 %289, %v158
    %v291 = vpop.permute.xlu0 %290
    %v293 = vlaneseq
    %v294 = vshrl.u32 %v293, 7
    %v295 = vsub.s32 7, %v294
    %v296 = vrot.slane %v155, %v295
    %v297 = vmul.f32 %v287, %v296
    %v298 = vmul.f32 %v291, %v296
    %v299 = vadd.f32 %v283, %v297
    %v300 = vadd.f32 %v284, %v298
    %301 = vset.pattern.permute.xlu0 8
    %302 = vperm.xlu0 %301, %v157
    %v303 = vpop.permute.xlu0 %302
    %305 = vset.pattern.permute.xlu0 8
    %306 = vperm.xlu0 %305, %v158
    %v307 = vpop.permute.xlu0 %306
    %v309 = vlaneseq
    %v310 = vshrl.u32 %v309, 7
    %v311 = vsub.s32 0, %v310
    %v312 = vrot.slane %v156, %v311
    %v313 = vmul.f32 %v303, %v312
    %v314 = vmul.f32 %v307, %v312
    %v315 = vadd.f32 %v299, %v313
    %v316 = vadd.f32 %v300, %v314
    %317 = vset.pattern.permute.xlu0 9
    %318 = vperm.xlu0 %317, %v157
    %v319 = vpop.permute.xlu0 %318
    %321 = vset.pattern.permute.xlu0 9
    %322 = vperm.xlu0 %321, %v158
    %v323 = vpop.permute.xlu0 %322
    %v325 = vlaneseq
    %v326 = vshrl.u32 %v325, 7
    %v327 = vsub.s32 1, %v326
    %v328 = vrot.slane %v156, %v327
    %v329 = vmul.f32 %v319, %v328
    %v330 = vmul.f32 %v323, %v328
    %v331 = vadd.f32 %v315, %v329
    %v332 = vadd.f32 %v316, %v330
    %v333 = vtanh.pop %v331
    %v334 = vtanh.pop %v332
    %v335 = vld [vmem:[%s7] sm:$0xff]
    %v336 = vld [vmem:[%s7 + $0x8] sm:$0x3]
    %v337 = vld [vmem:[%s8] sm:$0xff]
    %v338 = vld [vmem:[%s8 + $0x8] sm:$0x3]
    %340 = vset.pattern.permute.xlu0 0
    %341 = vperm.xlu0 %340, %v337
    %v342 = vpop.permute.xlu0 %341
    %345 = vset.pattern.permute.xlu0 0
    %346 = vperm.xlu0 %345, %v338
    %v347 = vpop.permute.xlu0 %346
    %350 = vset.pattern.permute.xlu0 0
    %351 = vperm.xlu0 %350, %v335
    %v352 = vpop.permute.xlu0 %351
    %355 = vset.pattern.permute.xlu0 0
    %356 = vperm.xlu0 %355, %v336
    %v357 = vpop.permute.xlu0 %356
    %v359 = vlaneseq
    %v360 = vshrl.u32 %v359, 7
    %v361 = vsub.s32 0, %v360
    %v362 = vrot.slane %v333, %v361
    %v363 = vmul.f32 %v352, %v362
    %v364 = vmul.f32 %v357, %v362
    %v365 = vadd.f32 %v342, %v363
    %v366 = vadd.f32 %v347, %v364
    %367 = vset.pattern.permute.xlu0 1
    %368 = vperm.xlu0 %367, %v335
    %v369 = vpop.permute.xlu0 %368
    %371 = vset.pattern.permute.xlu0 1
    %372 = vperm.xlu0 %371, %v336
    %v373 = vpop.permute.xlu0 %372
    %v375 = vlaneseq
    %v376 = vshrl.u32 %v375, 7
    %v377 = vsub.s32 1, %v376
    %v378 = vrot.slane %v333, %v377
    %v379 = vmul.f32 %v369, %v378
    %v380 = vmul.f32 %v373, %v378
    %v381 = vadd.f32 %v365, %v379
    %v382 = vadd.f32 %v366, %v380
    %383 = vset.pattern.permute.xlu0 2
    %384 = vperm.xlu0 %383, %v335
    %v385 = vpop.permute.xlu0 %384
    %387 = vset.pattern.permute.xlu0 2
    %388 = vperm.xlu0 %387, %v336
    %v389 = vpop.permute.xlu0 %388
    %v391 = vlaneseq
    %v392 = vshrl.u32 %v391, 7
    %v393 = vsub.s32 2, %v392
    %v394 = vrot.slane %v333, %v393
    %v395 = vmul.f32 %v385, %v394
    %v396 = vmul.f32 %v389, %v394
    %v397 = vadd.f32 %v381, %v395
    %v398 = vadd.f32 %v382, %v396
    %399 = vset.pattern.permute.xlu0 3
    %400 = vperm.xlu0 %399, %v335
    %v401 = vpop.permute.xlu0 %400
    %403 = vset.pattern.permute.xlu0 3
    %404 = vperm.xlu0 %403, %v336
    %v405 = vpop.permute.xlu0 %404
    %v407 = vlaneseq
    %v408 = vshrl.u32 %v407, 7
    %v409 = vsub.s32 3, %v408
    %v410 = vrot.slane %v333, %v409
    %v411 = vmul.f32 %v401, %v410
    %v412 = vmul.f32 %v405, %v410
    %v413 = vadd.f32 %v397, %v411
    %v414 = vadd.f32 %v398, %v412
    %415 = vset.pattern.permute.xlu0 4
    %416 = vperm.xlu0 %415, %v335
    %v417 = vpop.permute.xlu0 %416
    %419 = vset.pattern.permute.xlu0 4
    %420 = vperm.xlu0 %419, %v336
    %v421 = vpop.permute.xlu0 %420
    %v423 = vlaneseq
    %v424 = vshrl.u32 %v423, 7
    %v425 = vsub.s32 4, %v424
    %v426 = vrot.slane %v333, %v425
    %v427 = vmul.f32 %v417, %v426
    %v428 = vmul.f32 %v421, %v426
    %v429 = vadd.f32 %v413, %v427
    %v430 = vadd.f32 %v414, %v428
    %431 = vset.pattern.permute.xlu0 5
    %432 = vperm.xlu0 %431, %v335
    %v433 = vpop.permute.xlu0 %432
    %435 = vset.pattern.permute.xlu0 5
    %436 = vperm.xlu0 %435, %v336
    %v437 = vpop.permute.xlu0 %436
    %v439 = vlaneseq
    %v440 = vshrl.u32 %v439, 7
    %v441 = vsub.s32 5, %v440
    %v442 = vrot.slane %v333, %v441
    %v443 = vmul.f32 %v433, %v442
    %v444 = vmul.f32 %v437, %v442
    %v445 = vadd.f32 %v429, %v443
    %v446 = vadd.f32 %v430, %v444
    %447 = vset.pattern.permute.xlu0 6
    %448 = vperm.xlu0 %447, %v335
    %v449 = vpop.permute.xlu0 %448
    %451 = vset.pattern.permute.xlu0 6
    %452 = vperm.xlu0 %451, %v336
    %v453 = vpop.permute.xlu0 %452
    %v455 = vlaneseq
    %v456 = vshrl.u32 %v455, 7
    %v457 = vsub.s32 6, %v456
    %v458 = vrot.slane %v333, %v457
    %v459 = vmul.f32 %v449, %v458
    %v460 = vmul.f32 %v453, %v458
    %v461 = vadd.f32 %v445, %v459
    %v462 = vadd.f32 %v446, %v460
    %463 = vset.pattern.permute.xlu0 7
    %464 = vperm.xlu0 %463, %v335
    %v465 = vpop.permute.xlu0 %464
    %467 = vset.pattern.permute.xlu0 7
    %468 = vperm.xlu0 %467, %v336
    %v469 = vpop.permute.xlu0 %468
    %v471 = vlaneseq
    %v472 = vshrl.u32 %v471, 7
    %v473 = vsub.s32 7, %v472
    %v474 = vrot.slane %v333, %v473
    %v475 = vmul.f32 %v465, %v474
    %v476 = vmul.f32 %v469, %v474
    %v477 = vadd.f32 %v461, %v475
    %v478 = vadd.f32 %v462, %v476
    %479 = vset.pattern.permute.xlu0 8
    %480 = vperm.xlu0 %479, %v335
    %v481 = vpop.permute.xlu0 %480
    %483 = vset.pattern.permute.xlu0 8
    %484 = vperm.xlu0 %483, %v336
    %v485 = vpop.permute.xlu0 %484
    %v487 = vlaneseq
    %v488 = vshrl.u32 %v487, 7
    %v489 = vsub.s32 0, %v488
    %v490 = vrot.slane %v334, %v489
    %v491 = vmul.f32 %v481, %v490
    %v492 = vmul.f32 %v485, %v490
    %v493 = vadd.f32 %v477, %v491
    %v494 = vadd.f32 %v478, %v492
    %495 = vset.pattern.permute.xlu0 9
    %496 = vperm.xlu0 %495, %v335
    %v497 = vpop.permute.xlu0 %496
    %499 = vset.pattern.permute.xlu0 9
    %500 = vperm.xlu0 %499, %v336
    %v501 = vpop.permute.xlu0 %500
    %v503 = vlaneseq
    %v504 = vshrl.u32 %v503, 7
    %v505 = vsub.s32 1, %v504
    %v506 = vrot.slane %v334, %v505
    %v507 = vmul.f32 %v497, %v506
    %v508 = vmul.f32 %v501, %v506
    %v509 = vadd.f32 %v493, %v507
    %v510 = vadd.f32 %v494, %v508
    %511 = vset.pattern.permute.xlu0 10
    %512 = vperm.xlu0 %511, %v335
    %v513 = vpop.permute.xlu0 %512
    %515 = vset.pattern.permute.xlu0 10
    %516 = vperm.xlu0 %515, %v336
    %v517 = vpop.permute.xlu0 %516
    %v519 = vlaneseq
    %v520 = vshrl.u32 %v519, 7
    %v521 = vsub.s32 2, %v520
    %v522 = vrot.slane %v334, %v521
    %v523 = vmul.f32 %v513, %v522
    %v524 = vmul.f32 %v517, %v522
    %v525 = vadd.f32 %v509, %v523
    %v526 = vadd.f32 %v510, %v524
    %527 = vset.pattern.permute.xlu0 11
    %528 = vperm.xlu0 %527, %v335
    %v529 = vpop.permute.xlu0 %528
    %531 = vset.pattern.permute.xlu0 11
    %532 = vperm.xlu0 %531, %v336
    %v533 = vpop.permute.xlu0 %532
    %v535 = vlaneseq
    %v536 = vshrl.u32 %v535, 7
    %v537 = vsub.s32 3, %v536
    %v538 = vrot.slane %v334, %v537
    %v539 = vmul.f32 %v529, %v538
    %v540 = vmul.f32 %v533, %v538
    %v541 = vadd.f32 %v525, %v539
    %v542 = vadd.f32 %v526, %v540
    %543 = vset.pattern.permute.xlu0 12
    %544 = vperm.xlu0 %543, %v335
    %v545 = vpop.permute.xlu0 %544
    %547 = vset.pattern.permute.xlu0 12
    %548 = vperm.xlu0 %547, %v336
    %v549 = vpop.permute.xlu0 %548
    %v551 = vlaneseq
    %v552 = vshrl.u32 %v551, 7
    %v553 = vsub.s32 4, %v552
    %v554 = vrot.slane %v334, %v553
    %v555 = vmul.f32 %v545, %v554
    %v556 = vmul.f32 %v549, %v554
    %v557 = vadd.f32 %v541, %v555
    %v558 = vadd.f32 %v542, %v556
    %559 = vset.pattern.permute.xlu0 13
    %560 = vperm.xlu0 %559, %v335
    %v561 = vpop.permute.xlu0 %560
    %563 = vset.pattern.permute.xlu0 13
    %564 = vperm.xlu0 %563, %v336
    %v565 = vpop.permute.xlu0 %564
    %v567 = vlaneseq
    %v568 = vshrl.u32 %v567, 7
    %v569 = vsub.s32 5, %v568
    %v570 = vrot.slane %v334, %v569
    %v571 = vmul.f32 %v561, %v570
    %v572 = vmul.f32 %v565, %v570
    %v573 = vadd.f32 %v557, %v571
    %v574 = vadd.f32 %v558, %v572
    %575 = vset.pattern.permute.xlu0 14
    %576 = vperm.xlu0 %575, %v335
    %v577 = vpop.permute.xlu0 %576
    %579 = vset.pattern.permute.xlu0 14
    %580 = vperm.xlu0 %579, %v336
    %v581 = vpop.permute.xlu0 %580
    %v583 = vlaneseq
    %v584 = vshrl.u32 %v583, 7
    %v585 = vsub.s32 6, %v584
    %v586 = vrot.slane %v334, %v585
    %v587 = vmul.f32 %v577, %v586
    %v588 = vmul.f32 %v581, %v586
    %v589 = vadd.f32 %v573, %v587
    %v590 = vadd.f32 %v574, %v588
    %591 = vset.pattern.permute.xlu0 15
    %592 = vperm.xlu0 %591, %v335
    %v593 = vpop.permute.xlu0 %592
    %595 = vset.pattern.permute.xlu0 15
    %596 = vperm.xlu0 %595, %v336
    %v597 = vpop.permute.xlu0 %596
    %v599 = vlaneseq
    %v600 = vshrl.u32 %v599, 7
    %v601 = vsub.s32 7, %v600
    %v602 = vrot.slane %v334, %v601
    %v603 = vmul.f32 %v593, %v602
    %v604 = vmul.f32 %v597, %v602
    %v605 = vadd.f32 %v589, %v603
    %v606 = vadd.f32 %v590, %v604
    %v607 = vtanh.pop %v605
    %v608 = vtanh.pop %v606
    %v609 = vld [vmem:[%s9] sm:$0xf]
    %v610 = vld [vmem:[%s10] sm:$0xf]
    %612 = vset.pattern.permute.xlu0 0
    %613 = vperm.xlu0 %612, %v610
    %v614 = vpop.permute.xlu0 %613
    %617 = vset.pattern.permute.xlu0 0
    %618 = vperm.xlu0 %617, %v609
    %v619 = vpop.permute.xlu0 %618
    %v621 = vlaneseq
    %v622 = vshrl.u32 %v621, 7
    %v623 = vsub.s32 0, %v622
    %v624 = vrot.slane %v607, %v623
    %v625 = vmul.f32 %v619, %v624
    %v626 = vadd.f32 %v614, %v625
    %627 = vset.pattern.permute.xlu0 1
    %628 = vperm.xlu0 %627, %v609
    %v629 = vpop.permute.xlu0 %628
    %v631 = vlaneseq
    %v632 = vshrl.u32 %v631, 7
    %v633 = vsub.s32 1, %v632
    %v634 = vrot.slane %v607, %v633
    %v635 = vmul.f32 %v629, %v634
    %v636 = vadd.f32 %v626, %v635
    %637 = vset.pattern.permute.xlu0 2
    %638 = vperm.xlu0 %637, %v609
    %v639 = vpop.permute.xlu0 %638
    %v641 = vlaneseq
    %v642 = vshrl.u32 %v641, 7
    %v643 = vsub.s32 2, %v642
    %v644 = vrot.slane %v607, %v643
    %v645 = vmul.f32 %v639, %v644
    %v646 = vadd.f32 %v636, %v645
    %647 = vset.pattern.permute.xlu0 3
    %648 = vperm.xlu0 %647, %v609
    %v649 = vpop.permute.xlu0 %648
    %v651 = vlaneseq
    %v652 = vshrl.u32 %v651, 7
    %v653 = vsub.s32 3, %v652
    %v654 = vrot.slane %v607, %v653
    %v655 = vmul.f32 %v649, %v654
    %v656 = vadd.f32 %v646, %v655
    %657 = vset.pattern.permute.xlu0 4
    %658 = vperm.xlu0 %657, %v609
    %v659 = vpop.permute.xlu0 %658
    %v661 = vlaneseq
    %v662 = vshrl.u32 %v661, 7
    %v663 = vsub.s32 4, %v662
    %v664 = vrot.slane %v607, %v663
    %v665 = vmul.f32 %v659, %v664
    %v666 = vadd.f32 %v656, %v665
    %667 = vset.pattern.permute.xlu0 5
    %668 = vperm.xlu0 %667, %v609
    %v669 = vpop.permute.xlu0 %668
    %v671 = vlaneseq
    %v672 = vshrl.u32 %v671, 7
    %v673 = vsub.s32 5, %v672
    %v674 = vrot.slane %v607, %v673
    %v675 = vmul.f32 %v669, %v674
    %v676 = vadd.f32 %v666, %v675
    %677 = vset.pattern.permute.xlu0 6
    %678 = vperm.xlu0 %677, %v609
    %v679 = vpop.permute.xlu0 %678
    %v681 = vlaneseq
    %v682 = vshrl.u32 %v681, 7
    %v683 = vsub.s32 6, %v682
    %v684 = vrot.slane %v607, %v683
    %v685 = vmul.f32 %v679, %v684
    %v686 = vadd.f32 %v676, %v685
    %687 = vset.pattern.permute.xlu0 7
    %688 = vperm.xlu0 %687, %v609
    %v689 = vpop.permute.xlu0 %688
    %v691 = vlaneseq
    %v692 = vshrl.u32 %v691, 7
    %v693 = vsub.s32 7, %v692
    %v694 = vrot.slane %v607, %v693
    %v695 = vmul.f32 %v689, %v694
    %v696 = vadd.f32 %v686, %v695
    %697 = vset.pattern.permute.xlu0 8
    %698 = vperm.xlu0 %697, %v609
    %v699 = vpop.permute.xlu0 %698
    %v701 = vlaneseq
    %v702 = vshrl.u32 %v701, 7
    %v703 = vsub.s32 0, %v702
    %v704 = vrot.slane %v608, %v703
    %v705 = vmul.f32 %v699, %v704
    %v706 = vadd.f32 %v696, %v705
    %707 = vset.pattern.permute.xlu0 9
    %708 = vperm.xlu0 %707, %v609
    %v709 = vpop.permute.xlu0 %708
    %v711 = vlaneseq
    %v712 = vshrl.u32 %v711, 7
    %v713 = vsub.s32 1, %v712
    %v714 = vrot.slane %v608, %v713
    %v715 = vmul.f32 %v709, %v714
    %v716 = vadd.f32 %v706, %v715
    %v717 = vtanh.pop %v716
    %v718 = vld [vmem:[%s11] sm:$0x3]
    %v719 = vld [vmem:[%s12] sm:$0x3]
    %721 = vset.pattern.permute.xlu0 0
    %722 = vperm.xlu0 %721, %v719
    %v723 = vpop.permute.xlu0 %722
    %726 = vset.pattern.permute.xlu0 0
    %727 = vperm.xlu0 %726, %v718
    %v728 = vpop.permute.xlu0 %727
    %v730 = vlaneseq
    %v731 = vshrl.u32 %v730, 7
    %v732 = vsub.s32 0, %v731
    %v733 = vrot.slane %v717, %v732
    %v734 = vmul.f32 %v728, %v733
    %v735 = vadd.f32 %v723, %v734
    %736 = vset.pattern.permute.xlu0 1
    %737 = vperm.xlu0 %736, %v718
    %v738 = vpop.permute.xlu0 %737
    %v740 = vlaneseq
    %v741 = vshrl.u32 %v740, 7
    %v742 = vsub.s32 1, %v741
    %v743 = vrot.slane %v717, %v742
    %v744 = vmul.f32 %v738, %v743
    %v745 = vadd.f32 %v735, %v744
    %746 = vset.pattern.permute.xlu0 2
    %747 = vperm.xlu0 %746, %v718
    %v748 = vpop.permute.xlu0 %747
    %v750 = vlaneseq
    %v751 = vshrl.u32 %v750, 7
    %v752 = vsub.s32 2, %v751
    %v753 = vrot.slane %v717, %v752
    %v754 = vmul.f32 %v748, %v753
    %v755 = vadd.f32 %v745, %v754
    %756 = vset.pattern.permute.xlu0 3
    %757 = vperm.xlu0 %756, %v718
    %v758 = vpop.permute.xlu0 %757
    %v760 = vlaneseq
    %v761 = vshrl.u32 %v760, 7
    %v762 = vsub.s32 3, %v761
    %v763 = vrot.slane %v717, %v762
    %v764 = vmul.f32 %v758, %v763
    %v765 = vadd.f32 %v755, %v764
    %766 = vst [vmem:[#allocation2] sm:$0x3] %v765
    // Predicated region
    $region54: #{tpu_custom_call.1} parent=1 // pred_check
      _
    $region55: #{tpu_custom_call.1} parent=1 // pred_check_branch
      %768 = sbr.rel (0) target = $region57
    $region56: #{tpu_custom_call.1} parent=1 // pred_region
      %s770 = ssub.s32 32, 32
      %771 = vsyncadd [#allocation3], %s770
      %s773 = sshll.u32 [#allocation2], 4
      %s774 = int_to_ptr.vmem [resolvable:$true] %s773
      %776 = dma.vmem_to_hbm [thread:$0]  %s774, 32, %s13, [#allocation3]
    $region57: #{tpu_custom_call.1} parent=1 // pred_fallthru
      _
    // Predicated region
    $region58: #{tpu_custom_call.1} parent=1 // pred_check
      _
    $region59: #{tpu_custom_call.1} parent=1 // pred_check_branch
      %778 = sbr.rel (0) target = $region61
    $region60: #{tpu_custom_call.1} parent=1 // pred_region
      %779 = dma.done [#allocation3], 32
    $region61: #{tpu_custom_call.1} parent=1 // pred_fallthru
      _
    %780 = vsyncpa [#allocation3], 1

</llo_original>
